<compile_context>
chip_gen: v5e
topology: v5e:2x2
jax: 0.10.0
libtpu: 0.0.40
codegen_flags: <defaults>
</compile_context>

<pallas_src>
import functools

import jax
import jax.numpy as jnp
from jax import lax
from jax.experimental import pallas as pl
from jax.experimental.pallas import tpu as pltpu


def _focal_loss_partial_kernel(logits_ref, target_ref, ce_out_ref, bce_out_ref,
                               ce_acc, bce_acc, *,
                               use_doc, n_rows, tile_rows, tiles_per_split,
                               needs_mask):
    t = pl.program_id(1)
    last_t = pl.num_programs(1) - 1

    @pl.when(t == 0)
    def _init():
        ce_acc[...] = jnp.zeros_like(ce_acc)
        bce_acc[...] = jnp.zeros_like(bce_acc)

    logits = logits_ref[...].astype(jnp.float32)     # (TN, C)
    tgt = target_ref[...]                            # (TN, 1) int32
    tn, c = logits.shape

    # Row-validity mask: only materialized when padding / clamped duplicate
    # tiles can occur.  Uses the UNclamped global row id, so data re-read via
    # the clamped index_map contributes exactly zero.
    if needs_mask:
        s = pl.program_id(0)
        row0 = (s * tiles_per_split + t) * tile_rows
        row_ids = row0 + lax.broadcasted_iota(jnp.int32, (tn, 1), 0)
        valid = row_ids < n_rows                      # (TN, 1) bool
        mask = lambda x: jnp.where(valid, x, 0.0)
    else:
        mask = lambda x: x

    # one-hot(target), built in-kernel (avoids a gather)
    col = lax.broadcasted_iota(jnp.int32, (tn, c), 1)
    onehot = (col == tgt).astype(jnp.float32)         # (TN, C)

    # --- cross entropy: accumulate sum over rows of (logsumexp - target logit) ---
    m = jnp.max(logits, axis=-1, keepdims=True)                            # (TN, 1)
    lse = m + jnp.log(jnp.sum(jnp.exp(logits - m), axis=-1, keepdims=True))
    p_t = jnp.sum(logits * onehot, axis=-1, keepdims=True)                 # (TN, 1)
    ce_acc[...] += jnp.sum(mask(lse - p_t))

    if use_doc:
        # --- "doc" BCE(input as probabilities, one_hot(target)), summed ---
        # sum(bce) = -( sum_r log(p_t) + sum_{r,c} log(1-p) - sum_r log(1-p_t) )
        # with every log term clamped at -100 (PyTorch BCE semantics). Only the
        # log(1-p) term touches the full tile.
        log_pt = jnp.maximum(jnp.log(p_t), -100.0)                         # (TN, 1)
        log_1m_pt = jnp.maximum(jnp.log(1.0 - p_t), -100.0)                # (TN, 1)
        log_1m_all = jnp.maximum(jnp.log(1.0 - logits), -100.0)            # (TN, C)
        row_log1m = jnp.sum(log_1m_all, axis=-1, keepdims=True)            # (TN, 1)
        bce_row = -(log_pt + row_log1m - log_1m_pt)                        # (TN, 1)
        bce_acc[...] += jnp.sum(mask(bce_row))

    # --- emit this split's partial sums once, on its last reduction step ---
    @pl.when(t == last_t)
    def _emit():
        ce_out_ref[...] = ce_acc[...].reshape(1, 1, 1)
        bce_out_ref[...] = bce_acc[...].reshape(1, 1, 1)


def _choose_tile_rows(n, c, itemsize):
    """Rows per tile: large enough to pipeline well (hundreds of rows), small
    enough that 2x (double buffer) x TN x C x itemsize stays well under the
    scoped-VMEM defaults of every TPU generation (v7x: 32 of 64 MiB)."""
    per_buffer_budget = 4 * 1024 * 1024          # bytes; Pallas double-buffers this
    align = 16 if itemsize <= 2 else 8           # bf16 packs rows in pairs per sublane
    rows = per_buffer_budget // max(1, c * itemsize)
    rows = max(align, min(rows, 2048))
    rows = (rows // align) * align
    if n >= align:
        rows = min(rows, (n // align) * align)   # never make a block taller than the array
    else:
        rows = align
    return rows


def focal_loss(logits, target, *, gamma=2, use_doc=True, tile_rows=None,
               num_splits=None):
    """logits: [N, C] float, target: [N] int. Returns scalar float32 focal loss."""
    n, c = logits.shape
    target2d = target.reshape(n, 1).astype(jnp.int32)

    if tile_rows is None:
        tile_rows = _choose_tile_rows(n, c, jnp.dtype(logits.dtype).itemsize)
    tile_rows = max(8, (int(tile_rows) // 8) * 8)

    num_tiles = pl.cdiv(n, tile_rows)
    if num_splits is None:
        num_splits = 2 if num_tiles >= 2 else 1  # 2 "parallel" splits -> dual-TC on v7x
    num_splits = max(1, min(int(num_splits), num_tiles))
    tiles_per_split = pl.cdiv(num_tiles, num_splits)
    needs_mask = (num_splits * tiles_per_split * tile_rows) != n
    last_tile = num_tiles - 1

    def block_index(s, t):
        gt = s * tiles_per_split + t
        return (jnp.minimum(gt, last_tile), 0)   # clamp fully-OOB tiles (masked in-kernel)

    kernel = functools.partial(
        _focal_loss_partial_kernel,
        use_doc=use_doc, n_rows=n, tile_rows=tile_rows,
        tiles_per_split=tiles_per_split, needs_mask=needs_mask)

    ce_parts, bce_parts = pl.pallas_call(
        kernel,
        out_shape=(jax.ShapeDtypeStruct((num_splits, 1, 1), jnp.float32),
                   jax.ShapeDtypeStruct((num_splits, 1, 1), jnp.float32)),
        grid_spec=pltpu.PrefetchScalarGridSpec(
            num_scalar_prefetch=0,
            grid=(num_splits, tiles_per_split),
            in_specs=[
                pl.BlockSpec((tile_rows, c), block_index),
                pl.BlockSpec((tile_rows, 1), block_index),
            ],
            out_specs=(
                pl.BlockSpec((1, 1, 1), lambda s, t: (s, 0, 0)),
                pl.BlockSpec((1, 1, 1), lambda s, t: (s, 0, 0)),
            ),
            scratch_shapes=[
                pltpu.VMEM((1, 1), jnp.float32),   # running CE sum (per split)
                pltpu.VMEM((1, 1), jnp.float32),   # running BCE sum (per split)
            ],
        ),
        compiler_params=pltpu.CompilerParams(
            dimension_semantics=("parallel", "arbitrary"),
            vmem_limit_bytes=32 * 1024 * 1024,
        ),
    )(logits, target2d)

    # O(1) combine + nonlinear focal transform (scalar work, done once).
    base = jnp.sum(ce_parts) * (1.0 / n)
    if use_doc:
        base = base + jnp.sum(bce_parts) * (1.0 / (n * c))
    pt = jnp.exp(-base)
    om = 1.0 - pt
    if isinstance(gamma, int):
        w = lax.integer_pow(om, gamma)
    else:
        w = om ** jnp.float32(gamma)
    return (w * base).astype(jnp.float32)


def _focal_loss_ref(logits, target, *, gamma=2, use_doc=True):
    """Pure-JAX reference mirroring the PyTorch module (for sanity check)."""
    n, c = logits.shape
    onehot = jax.nn.one_hot(target, c, dtype=jnp.float32)
    lse = jax.nn.logsumexp(logits.astype(jnp.float32), axis=-1)
    ce = jnp.mean(lse - jnp.sum(logits * onehot, axis=-1))
    base = ce
    if use_doc:
        log_p = jnp.maximum(jnp.log(logits), -100.0)
        log_1mp = jnp.maximum(jnp.log(1.0 - logits), -100.0)
        bce = -(onehot * log_p + (1.0 - onehot) * log_1mp)
        base = base + jnp.mean(bce)
    pt = jnp.exp(-base)
    return ((1.0 - pt) ** gamma) * base


if __name__ == "__main__":
    key = jax.random.PRNGKey(0)
    k1, k2, k3, k4, k5, k6 = jax.random.split(key, 6)

    # The module feeds raw `input` both to cross_entropy and (as probabilities)
    # to binary_cross_entropy, so keep values in (0, 1).
    # NOTE: `alphas` is stored by the module but never used in forward().
    N, C = 8, 32
    logits = jax.nn.sigmoid(jax.random.normal(k1, (N, C), dtype=jnp.float32))
    target = jax.random.randint(k2, (N,), 0, C, dtype=jnp.int32)

    out = jax.block_until_ready(focal_loss(logits, target, gamma=2, use_doc=True))
    ref = _focal_loss_ref(logits, target, gamma=2, use_doc=True)
    assert jnp.allclose(out, ref, rtol=1e-5, atol=1e-5), (out, ref)

    # Multi-tile path: uneven split (3 tiles over 2 splits) + partial last tile
    # (grid accumulation, clamped index_map, row masking).
    N2 = 20
    logits2 = jax.nn.sigmoid(jax.random.normal(k3, (N2, C), dtype=jnp.float32))
    target2 = jax.random.randint(k4, (N2,), 0, C, dtype=jnp.int32)
    out2 = jax.block_until_ready(
        focal_loss(logits2, target2, gamma=2, use_doc=True, tile_rows=8))
    ref2 = _focal_loss_ref(logits2, target2, gamma=2, use_doc=True)
    assert jnp.allclose(out2, ref2, rtol=1e-5, atol=1e-5), (out2, ref2)

    # use_doc=False path.
    out3 = jax.block_until_ready(
        focal_loss(logits2, target2, gamma=2, use_doc=False, tile_rows=8))
    ref3 = _focal_loss_ref(logits2, target2, gamma=2, use_doc=False)
    assert jnp.allclose(out3, ref3, rtol=1e-5, atol=1e-5), (out3, ref3)

    # Even split, no masking (4 tiles over 2 splits, exact coverage).
    N3 = 64
    logits3 = jax.nn.sigmoid(jax.random.normal(k5, (N3, C), dtype=jnp.float32))
    target3 = jax.random.randint(k6, (N3,), 0, C, dtype=jnp.int32)
    out4 = jax.block_until_ready(
        focal_loss(logits3, target3, gamma=2, use_doc=True, tile_rows=16))
    ref4 = _focal_loss_ref(logits3, target3, gamma=2, use_doc=True)
    assert jnp.allclose(out4, ref4, rtol=1e-5, atol=1e-5), (out4, ref4)

    print("KERNEL_OK")
</pallas_src>

<mosaic_0001>
module attributes {stable_mosaic.version = 11 : i64} {
  func.func @_focal_loss_partial_kernel(%arg0: i32, %arg1: i32, %arg2: memref<8x32xf32, #tpu.memory_space<vmem>>, %arg3: memref<8x1xi32, #tpu.memory_space<vmem>>, %arg4: memref<1x1x1xf32, #tpu.memory_space<vmem>>, %arg5: memref<1x1x1xf32, #tpu.memory_space<vmem>>, %arg6: memref<1x1xf32, #tpu.memory_space<vmem>>, %arg7: memref<1x1xf32, #tpu.memory_space<vmem>>) attributes {dimension_semantics = [#tpu.dimension_semantics<parallel>, #tpu.dimension_semantics<arbitrary>], iteration_bounds = array<i64: 1, 1>, scalar_prefetch = 0 : i64, scratch_operands = 2 : i64, tpu.core_type = #tpu.core_type<tc>, window_params = [{transform_indices = @transform_0, window_bounds = array<i64: 8, 32>}, {transform_indices = @transform_1, window_bounds = array<i64: 8, 1>}, {transform_indices = @transform_2, window_bounds = array<i64: 1, 1, 1>}, {transform_indices = @transform_3, window_bounds = array<i64: 1, 1, 1>}]} {
    %c0_i32 = arith.constant 0 : i32
    %0 = arith.cmpi eq, %arg1, %c0_i32 : i32
    %1 = arith.extui %0 : i1 to i32
    %c0_i32_0 = arith.constant 0 : i32
    %2 = arith.cmpi ne, %1, %c0_i32_0 : i32
    scf.if %2 {
      %cst_25 = arith.constant 0.000000e+00 : f32
      %61 = vector.broadcast %cst_25 : f32 to vector<1x1xf32>
      %c0_26 = arith.constant 0 : index
      %c0_27 = arith.constant 0 : index
      %62 = vector.load %arg6[%c0_26, %c0_27] : memref<1x1xf32, #tpu.memory_space<vmem>>, vector<1x1xf32>
      tpu.vector_store %arg6[%c0_26, %c0_27], %61 {strides = array<i32>} : memref<1x1xf32, #tpu.memory_space<vmem>>, vector<1x1xf32>,
      %cst_28 = arith.constant 0.000000e+00 : f32
      %63 = vector.broadcast %cst_28 : f32 to vector<1x1xf32>
      %c0_29 = arith.constant 0 : index
      %c0_30 = arith.constant 0 : index
      %64 = vector.load %arg7[%c0_29, %c0_30] : memref<1x1xf32, #tpu.memory_space<vmem>>, vector<1x1xf32>
      tpu.vector_store %arg7[%c0_29, %c0_30], %63 {strides = array<i32>} : memref<1x1xf32, #tpu.memory_space<vmem>>, vector<1x1xf32>,
    } else {
    }
    %c0 = arith.constant 0 : index
    %c0_1 = arith.constant 0 : index
    %3 = vector.load %arg2[%c0, %c0_1] : memref<8x32xf32, #tpu.memory_space<vmem>>, vector<8x32xf32>
    %c0_2 = arith.constant 0 : index
    %c0_3 = arith.constant 0 : index
    %4 = vector.load %arg3[%c0_2, %c0_3] : memref<8x1xi32, #tpu.memory_space<vmem>>, vector<8x1xi32>
    %5 = tpu.iota {dimensions = array<i32: 1>} : vector<8x32xi32>
    %6 = vector.broadcast %4 : vector<8x1xi32> to vector<8x32xi32>
    %7 = arith.cmpi eq, %5, %6 : vector<8x32xi32>
    %8 = arith.extui %7 : vector<8x32xi1> to vector<8x32xi32>
    %9 = arith.sitofp %8 : vector<8x32xi32> to vector<8x32xf32>
    %cst = arith.constant dense<0xFF800000> : vector<8xf32>
    %10 = vector.multi_reduction <maximumf>, %3, %cst [1] : vector<8x32xf32> to vector<8xf32>
    %11 = vector.shape_cast %10 : vector<8xf32> to vector<8x1xf32>
    %12 = vector.broadcast %11 : vector<8x1xf32> to vector<8x32xf32>
    %13 = arith.subf %3, %12 : vector<8x32xf32>
    %14 = math.exp %13 : vector<8x32xf32>
    %cst_4 = arith.constant dense<0.000000e+00> : vector<8xf32>
    %15 = vector.multi_reduction <add>, %14, %cst_4 [1] : vector<8x32xf32> to vector<8xf32>
    %16 = vector.shape_cast %15 : vector<8xf32> to vector<8x1xf32>
    %17 = math.log %16 : vector<8x1xf32>
    %18 = arith.addf %11, %17 : vector<8x1xf32>
    %19 = arith.mulf %3, %9 : vector<8x32xf32>
    %cst_5 = arith.constant dense<0.000000e+00> : vector<8xf32>
    %20 = vector.multi_reduction <add>, %19, %cst_5 [1] : vector<8x32xf32> to vector<8xf32>
    %21 = vector.shape_cast %20 : vector<8xf32> to vector<8x1xf32>
    %c0_6 = arith.constant 0 : index
    %c0_7 = arith.constant 0 : index
    %22 = vector.load %arg6[%c0_6, %c0_7] : memref<1x1xf32, #tpu.memory_space<vmem>>, vector<1x1xf32>
    %23 = arith.subf %18, %21 : vector<8x1xf32>
    %24 = vector.shape_cast %23 : vector<8x1xf32> to vector<1x8x1xf32>
    %cst_8 = arith.constant dense<0.000000e+00> : vector<1xf32>
    %25 = vector.multi_reduction <add>, %24, %cst_8 [1, 2] : vector<1x8x1xf32> to vector<1xf32>
    %26 = vector.shape_cast %25 : vector<1xf32> to vector<1x1x1xf32>
    %27 = vector.extract %26[0, 0, 0] : f32 from vector<1x1x1xf32>
    %28 = vector.broadcast %27 : f32 to vector<1x1xf32>
    %29 = arith.addf %22, %28 : vector<1x1xf32>
    %c0_9 = arith.constant 0 : index
    %c0_10 = arith.constant 0 : index
    %30 = vector.load %arg6[%c0_9, %c0_10] : memref<1x1xf32, #tpu.memory_space<vmem>>, vector<1x1xf32>
    tpu.vector_store %arg6[%c0_9, %c0_10], %29 {strides = array<i32>} : memref<1x1xf32, #tpu.memory_space<vmem>>, vector<1x1xf32>,
    %31 = math.log %21 : vector<8x1xf32>
    %cst_11 = arith.constant -1.000000e+02 : f32
    %32 = vector.broadcast %cst_11 : f32 to vector<8x1xf32>
    %33 = arith.maximumf %31, %32 : vector<8x1xf32>
    %cst_12 = arith.constant 1.000000e+00 : f32
    %34 = vector.broadcast %cst_12 : f32 to vector<8x1xf32>
    %35 = arith.subf %34, %21 : vector<8x1xf32>
    %36 = math.log %35 : vector<8x1xf32>
    %cst_13 = arith.constant -1.000000e+02 : f32
    %37 = vector.broadcast %cst_13 : f32 to vector<8x1xf32>
    %38 = arith.maximumf %36, %37 : vector<8x1xf32>
    %cst_14 = arith.constant 1.000000e+00 : f32
    %39 = vector.broadcast %cst_14 : f32 to vector<8x32xf32>
    %40 = arith.subf %39, %3 : vector<8x32xf32>
    %41 = math.log %40 : vector<8x32xf32>
    %cst_15 = arith.constant -1.000000e+02 : f32
    %42 = vector.broadcast %cst_15 : f32 to vector<8x32xf32>
    %43 = arith.maximumf %41, %42 : vector<8x32xf32>
    %cst_16 = arith.constant dense<0.000000e+00> : vector<8xf32>
    %44 = vector.multi_reduction <add>, %43, %cst_16 [1] : vector<8x32xf32> to vector<8xf32>
    %45 = vector.shape_cast %44 : vector<8xf32> to vector<8x1xf32>
    %46 = arith.addf %33, %45 : vector<8x1xf32>
    %47 = arith.subf %46, %38 : vector<8x1xf32>
    %cst_17 = arith.constant 0.000000e+00 : f32
    %48 = vector.broadcast %cst_17 : f32 to vector<8x1xf32>
    %49 = arith.subf %48, %47 : vector<8x1xf32>
    %c0_18 = arith.constant 0 : index
    %c0_19 = arith.constant 0 : index
    %50 = vector.load %arg7[%c0_18, %c0_19] : memref<1x1xf32, #tpu.memory_space<vmem>>, vector<1x1xf32>
    %51 = vector.shape_cast %49 : vector<8x1xf32> to vector<1x8x1xf32>
    %cst_20 = arith.constant dense<0.000000e+00> : vector<1xf32>
    %52 = vector.multi_reduction <add>, %51, %cst_20 [1, 2] : vector<1x8x1xf32> to vector<1xf32>
    %53 = vector.shape_cast %52 : vector<1xf32> to vector<1x1x1xf32>
    %54 = vector.extract %53[0, 0, 0] : f32 from vector<1x1x1xf32>
    %55 = vector.broadcast %54 : f32 to vector<1x1xf32>
    %56 = arith.addf %50, %55 : vector<1x1xf32>
    %c0_21 = arith.constant 0 : index
    %c0_22 = arith.constant 0 : index
    %57 = vector.load %arg7[%c0_21, %c0_22] : memref<1x1xf32, #tpu.memory_space<vmem>>, vector<1x1xf32>
    tpu.vector_store %arg7[%c0_21, %c0_22], %56 {strides = array<i32>} : memref<1x1xf32, #tpu.memory_space<vmem>>, vector<1x1xf32>,
    %c0_i32_23 = arith.constant 0 : i32
    %58 = arith.cmpi eq, %arg1, %c0_i32_23 : i32
    %59 = arith.extui %58 : i1 to i32
    %c0_i32_24 = arith.constant 0 : i32
    %60 = arith.cmpi ne, %59, %c0_i32_24 : i32
    scf.if %60 {
      %c0_25 = arith.constant 0 : index
      %c0_26 = arith.constant 0 : index
      %61 = vector.load %arg6[%c0_25, %c0_26] : memref<1x1xf32, #tpu.memory_space<vmem>>, vector<1x1xf32>
      %62 = vector.shape_cast %61 : vector<1x1xf32> to vector<1x1x1xf32>
      %c0_27 = arith.constant 0 : index
      %c0_28 = arith.constant 0 : index
      %c0_29 = arith.constant 0 : index
      %63 = vector.load %arg4[%c0_27, %c0_28, %c0_29] : memref<1x1x1xf32, #tpu.memory_space<vmem>>, vector<1x1x1xf32>
      tpu.vector_store %arg4[%c0_27, %c0_28, %c0_29], %62 {strides = array<i32>} : memref<1x1x1xf32, #tpu.memory_space<vmem>>, vector<1x1x1xf32>,
      %c0_30 = arith.constant 0 : index
      %c0_31 = arith.constant 0 : index
      %64 = vector.load %arg7[%c0_30, %c0_31] : memref<1x1xf32, #tpu.memory_space<vmem>>, vector<1x1xf32>
      %65 = vector.shape_cast %64 : vector<1x1xf32> to vector<1x1x1xf32>
      %c0_32 = arith.constant 0 : index
      %c0_33 = arith.constant 0 : index
      %c0_34 = arith.constant 0 : index
      %66 = vector.load %arg5[%c0_32, %c0_33, %c0_34] : memref<1x1x1xf32, #tpu.memory_space<vmem>>, vector<1x1x1xf32>
      tpu.vector_store %arg5[%c0_32, %c0_33, %c0_34], %65 {strides = array<i32>} : memref<1x1x1xf32, #tpu.memory_space<vmem>>, vector<1x1x1xf32>,
    } else {
    }
    return
  }
  func.func @transform_0(%arg0: i32, %arg1: i32) -> (i32, i32) {
    %c1_i32 = arith.constant 1 : i32
    %0 = arith.muli %arg0, %c1_i32 : i32
    %1 = arith.addi %0, %arg1 : i32
    %c0_i32 = arith.constant 0 : i32
    %2 = arith.minsi %1, %c0_i32 : i32
    %c0_i32_0 = arith.constant 0 : i32
    %c0_i32_1 = arith.constant 0 : i32
    return %2, %c0_i32_0 : i32, i32
  }
  func.func @transform_1(%arg0: i32, %arg1: i32) -> (i32, i32) {
    %c1_i32 = arith.constant 1 : i32
    %0 = arith.muli %arg0, %c1_i32 : i32
    %1 = arith.addi %0, %arg1 : i32
    %c0_i32 = arith.constant 0 : i32
    %2 = arith.minsi %1, %c0_i32 : i32
    %c0_i32_0 = arith.constant 0 : i32
    %c0_i32_1 = arith.constant 0 : i32
    return %2, %c0_i32_0 : i32, i32
  }
  func.func @transform_2(%arg0: i32, %arg1: i32) -> (i32, i32, i32) {
    %c0_i32 = arith.constant 0 : i32
    %c0_i32_0 = arith.constant 0 : i32
    %c0_i32_1 = arith.constant 0 : i32
    return %arg0, %c0_i32, %c0_i32_0 : i32, i32, i32
  }
  func.func @transform_3(%arg0: i32, %arg1: i32) -> (i32, i32, i32) {
    %c0_i32 = arith.constant 0 : i32
    %c0_i32_0 = arith.constant 0 : i32
    %c0_i32_1 = arith.constant 0 : i32
    return %arg0, %c0_i32, %c0_i32_0 : i32, i32, i32
  }
}

</mosaic_0001>

<llo_original>
// kernel: tpu_custom_call.1
$region0: #{tpu_custom_call.1}
  #allocation0 [shape = 'u32[]', space=smem, size = 0x4, offset = 0x4, fixed_abs, tag = 'smem constant byte address 0x4 - core index']
  #allocation1 [shape = 'u32[72,128]{1,0:T(1,128)}', space=vmem, size = 0x9000, scoped, tag = 'internal scratch']
  #allocation2 [shape = 'f32[1,1]{1,0:T(1,128)}', space=vmem, size = 0x200, scoped, tag = 'scratch operand']
  #allocation3 [shape = 'f32[1,1]{1,0:T(1,128)}', space=vmem, size = 0x200, scoped, tag = 'scratch operand']
  %s0 = inlined_call_operand.vmem [shape: f32[8,32], index: 0, kind: input, shape index: {}]
  %s1 = inlined_call_operand.vmem [shape: s32[8,1], index: 1, kind: input, shape index: {}]
  %s2 = inlined_call_operand.hbm [shape: f32[1,1,1], index: 2, kind: output, shape index: {0}]
  %s3 = inlined_call_operand.hbm [shape: f32[1,1,1], index: 3, kind: output, shape index: {1}]
  %4 = xla_tuple %s2, %s3
  %s5 = sld [smem:[#allocation0]]
  $region34: #{tpu_custom_call.1} parent=0
    _
  %s7 = ssub.s32 1, %s5
  %s8 = scalar_select 0, %s7, %s5
  $region1: #{tpu_custom_call.1} parent=0
    #allocation4 [shape = 'u8[512]{0}', space=vmem, size = 0x400, scoped, tag = 'output window, operand 0, single buffered']
    #allocation5 [shape = 's32[1]{0}', space=sflag, size = 0x4, scoped, tag = 'scoped memory for tpu_custom_call.1']
    #allocation6 [shape = 'u8[512]{0}', space=vmem, size = 0x400, scoped, tag = 'output window, operand 1, single buffered']
    #allocation7 [shape = 's32[1]{0}', space=sflag, size = 0x4, scoped, tag = 'scoped memory for tpu_custom_call.1']
    %9 = vsyncpa [#allocation5], 0
    %10 = vsyncpa [#allocation7], 0
    // Predicated region
    $region2: #{tpu_custom_call.1} parent=1 // pred_check
      _
    $region3: #{tpu_custom_call.1} parent=1 // pred_check_branch
      %12 = sbr.rel (0) target = $region5
    $region4: #{tpu_custom_call.1} parent=1 // pred_region
      %s13 = sadd.s32 0, 0
      %p14 = scmp.lt.s32.totalorder %s13, 0
      %s15 = scalar_select %p14, %s13, 0
      %p16 = scmp.lt.s32.totalorder %s15, 0
      %s17 = scalar_select %p16, %s15, 0
      %s18 = smul.addr %s17, 8
      %s19 = scalar_lea.vmem %s0, %s18
      %s20 = sadd.s32 0, 0
      %p21 = scmp.lt.s32.totalorder %s20, 0
      %s22 = scalar_select %p21, %s20, 0
    $region5: #{tpu_custom_call.1} parent=1 // pred_fallthru
      _
    // Predicated region
    $region6: #{tpu_custom_call.1} parent=1 // pred_check
      _
    $region7: #{tpu_custom_call.1} parent=1 // pred_check_branch
      %24 = sbr.rel (0) target = $region9
    $region8: #{tpu_custom_call.1} parent=1 // pred_region
      %s25 = sadd.s32 0, 0
      %p26 = scmp.lt.s32.totalorder %s25, 0
      %s27 = scalar_select %p26, %s25, 0
      %p28 = scmp.lt.s32.totalorder %s27, 0
      %s29 = scalar_select %p28, %s27, 0
      %s30 = smul.addr %s29, 8
      %s31 = scalar_lea.vmem %s1, %s30
      %s32 = sadd.s32 0, 0
      %p33 = scmp.lt.s32.totalorder %s32, 0
      %s34 = scalar_select %p33, %s32, 0
    $region9: #{tpu_custom_call.1} parent=1 // pred_fallthru
      _
    %s35 = sadd.s32 0, 0
    %p36 = scmp.lt.s32.totalorder %s35, 0
    %s37 = scalar_select %p36, %s35, 0
    %p38 = scmp.lt.s32.totalorder %s37, 0
    %s39 = scalar_select %p38, %s37, 0
    %s40 = smul.addr %s39, 8
    %s41 = scalar_lea.vmem %s0, %s40
    %s42 = sadd.s32 0, 0
    %p43 = scmp.lt.s32.totalorder %s42, 0
    %s44 = scalar_select %p43, %s42, 0
    %p45 = scmp.lt.s32.totalorder %s44, 0
    %s46 = scalar_select %p45, %s44, 0
    %s47 = smul.addr %s46, 8
    %s48 = scalar_lea.vmem %s1, %s47
    %s49 = sadd.s32 0, 0
    %p50 = scmp.lt.s32.totalorder %s49, 0
    %s51 = scalar_select %p50, %s49, 0
    %p52 = scmp.lt.s32.totalorder %s51, 0
    %s53 = scalar_select %p52, %s51, 0
    %s54 = smul.addr %s53, 8
    %s55 = scalar_lea.vmem %s0, %s54
    %s56 = sadd.s32 0, 0
    %p57 = scmp.lt.s32.totalorder %s56, 0
    %s58 = scalar_select %p57, %s56, 0
    %s59 = sadd.s32 0, 0
    %p60 = scmp.lt.s32.totalorder %s59, 0
    %s61 = scalar_select %p60, %s59, 0
    %p62 = scmp.lt.s32.totalorder %s61, 0
    %s63 = scalar_select %p62, %s61, 0
    %s64 = smul.addr %s63, 8
    %s65 = scalar_lea.vmem %s1, %s64
    %s66 = sadd.s32 0, 0
    %p67 = scmp.lt.s32.totalorder %s66, 0
    %s68 = scalar_select %p67, %s66, 0
    %p69 = scmp.eq.s32.totalorder 0, 0
    // Predicated region
    $region10: #{tpu_custom_call.1} parent=1 // pred_check
      %p70 = pneg %p69
    $region11: #{tpu_custom_call.1} parent=1 // pred_check_branch
      %72 = sbr.rel (%p70) target = $region13
    $region12: #{tpu_custom_call.1} parent=1 // pred_region
      %vm73 = vcmask 0
      %74 = vst.msk [vmem:[#allocation2] sm:$0x1] %vm73, 0.0
      %75 = vst.msk [vmem:[#allocation3] sm:$0x1] %vm73, 0.0
    $region13: #{tpu_custom_call.1} parent=1 // pred_fallthru
      _
    %v76 = vld [vmem:[%s55] sm:$0xff]
    %v77 = vld [vmem:[%s65] sm:$0xff]
    %v78 = vlaneseq
    %v79 = vand.u32 %v78, 127
    %80 = vset.pattern.permute.xlu0 0
    %81 = vperm.xlu0 %80, %v77
    %v82 = vpop.permute.xlu0 %81
    %vm83 = vcmp.eq.s32.totalorder %v79, %v82
    %v84 = vsel %vm83, 1, 0
    %v85 = vcvt.s32.f32 %v84
    %vm86 = vcmask 261120
    %v87 = vsel %vm86, %v76, -inf
    %88 = vmax.xlane.f32.xlu0 %v87
    %v89 = vpop.xlane.xlu0 %88
    %v90 = vsub.f32 %v76, %v89
    %v91 = vmul.f32 %v90, 1.442695
    %v92 = vpow.pop %v91
    %v93 = vsel %vm86, %v92, 0.0
    %94 = vadd.xlane.f32.xlu0 %v93
    %v95 = vpop.xlane.xlu0 %94
    %v96 = vlog2.pop %v95
    %v97 = vmul.f32 %v96, 0.6931472
    %v98 = vadd.f32 %v89, %v97
    %v99 = vmul.f32 %v76, %v85
    %v100 = vsel %vm86, %v99, 0.0
    %101 = vadd.xlane.f32.xlu0 %v100
    %v102 = vpop.xlane.xlu0 %101
    %v103 = vld [vmem:[#allocation2] sm:$0x1]
    %v104 = vsub.f32 %v98, %v102
    %vm105 = vcmask 7168
    %v106 = vsel %vm105, %v104, 0.0
    %107 = vadd.xlane.f32.xlu0 %v106
    %v108 = vpop.xlane.xlu0 %107
    %v109 = vrot.slane %v108, 4
    %v110 = vadd.f32 %v108, %v109
    %v111 = vrot.slane %v110, 2
    %v112 = vadd.f32 %v110, %v111
    %v113 = vrot.slane %v112, 1
    %v114 = vadd.f32 %v112, %v113
    %s115 = vtos %v114
    %v116 = vstv %s115
    %v117 = vadd.f32 %v103, %v116
    %vm118 = vcmask 0
    %119 = vst.msk [vmem:[#allocation2] sm:$0x1] %vm118, %v117
    %v120 = vlog2.pop %v102
    %v121 = vmul.f32 %v120, 0.6931472
    %v122 = vmax.f32 %v121, -100.0
    %v123 = vsub.f32 1.0, %v102
    %v124 = vlog2.pop %v123
    %v125 = vmul.f32 %v124, 0.6931472
    %v126 = vmax.f32 %v125, -100.0
    %v127 = vsub.f32 1.0, %v76
    %v128 = vlog2.pop %v127
    %v129 = vmul.f32 %v128, 0.6931472
    %v130 = vmax.f32 %v129, -100.0
    %v131 = vsel %vm86, %v130, 0.0
    %132 = vadd.xlane.f32.xlu0 %v131
    %v133 = vpop.xlane.xlu0 %132
    %v134 = vadd.f32 %v122, %v133
    %v135 = vsub.f32 %v134, %v126
    %v136 = vsub.f32 0.0, %v135
    %v137 = vld [vmem:[#allocation3] sm:$0x1]
    %v138 = vsel %vm105, %v136, 0.0
    %139 = vadd.xlane.f32.xlu0 %v138
    %v140 = vpop.xlane.xlu0 %139
    %v141 = vrot.slane %v140, 4
    %v142 = vadd.f32 %v140, %v141
    %v143 = vrot.slane %v142, 2
    %v144 = vadd.f32 %v142, %v143
    %v145 = vrot.slane %v144, 1
    %v146 = vadd.f32 %v144, %v145
    %s147 = vtos %v146
    %v148 = vstv %s147
    %v149 = vadd.f32 %v137, %v148
    %150 = vst.msk [vmem:[#allocation3] sm:$0x1] %vm118, %v149
    // Predicated region
    $region14: #{tpu_custom_call.1} parent=1 // pred_check
      %p151 = pneg %p69
    $region15: #{tpu_custom_call.1} parent=1 // pred_check_branch
      %153 = sbr.rel (%p151) target = $region17
    $region16: #{tpu_custom_call.1} parent=1 // pred_region
      %v154 = vld [vmem:[#allocation2] sm:$0x1]
      %155 = vst.msk [vmem:[#allocation4] sm:$0x1] %vm118, %v154
      %v156 = vld [vmem:[#allocation3] sm:$0x1]
      %157 = vst.msk [vmem:[#allocation6] sm:$0x1] %vm118, %v156
    $region17: #{tpu_custom_call.1} parent=1 // pred_fallthru
      _
    // Predicated region
    $region18: #{tpu_custom_call.1} parent=1 // pred_check
      _
    $region19: #{tpu_custom_call.1} parent=1 // pred_check_branch
      %159 = sbr.rel (0) target = $region21
    $region20: #{tpu_custom_call.1} parent=1 // pred_region
      %161 = vsyncadd [#allocation5], 0
      %s163 = sshll.u32 [#allocation4], 4
      %s164 = int_to_ptr.vmem [resolvable:$true] %s163
      %s165 = sshll.u32 %s2, 4
      %s166 = int_to_ptr.hbm [resolvable:$true] %s165
      %168 = dma.vmem_to_hbm [thread:$0]  %s164, 16, %s166, [#allocation5]
    $region21: #{tpu_custom_call.1} parent=1 // pred_fallthru
      _
    // Predicated region
    $region22: #{tpu_custom_call.1} parent=1 // pred_check
      _
    $region23: #{tpu_custom_call.1} parent=1 // pred_check_branch
      %170 = sbr.rel (0) target = $region25
    $region24: #{tpu_custom_call.1} parent=1 // pred_region
      %172 = vsyncadd [#allocation7], 0
      %s174 = sshll.u32 [#allocation6], 4
      %s175 = int_to_ptr.vmem [resolvable:$true] %s174
      %s176 = sshll.u32 %s3, 4
      %s177 = int_to_ptr.hbm [resolvable:$true] %s176
      %179 = dma.vmem_to_hbm [thread:$0]  %s175, 16, %s177, [#allocation7]
    $region25: #{tpu_custom_call.1} parent=1 // pred_fallthru
      _
    // Predicated region
    $region26: #{tpu_custom_call.1} parent=1 // pred_check
      _
    $region27: #{tpu_custom_call.1} parent=1 // pred_check_branch
      %181 = sbr.rel (0) target = $region29
    $region28: #{tpu_custom_call.1} parent=1 // pred_region
      %183 = dma.done [#allocation5], 16
    $region29: #{tpu_custom_call.1} parent=1 // pred_fallthru
      _
    // Predicated region
    $region30: #{tpu_custom_call.1} parent=1 // pred_check
      _
    $region31: #{tpu_custom_call.1} parent=1 // pred_check_branch
      %185 = sbr.rel (0) target = $region33
    $region32: #{tpu_custom_call.1} parent=1 // pred_region
      %187 = dma.done [#allocation7], 16
    $region33: #{tpu_custom_call.1} parent=1 // pred_fallthru
      _
    %188 = vsyncpa [#allocation5], 1
    %189 = vsyncpa [#allocation7], 1

</llo_original>
